<compile_context>
chip_gen: v5e
topology: v5e:2x2
jax: 0.10.0
libtpu: 0.0.40
codegen_flags: <defaults>
</compile_context>

<pallas_src>
import math

import jax
import jax.numpy as jnp
from jax.experimental import pallas as pl
from jax.experimental.pallas import tpu as pltpu

INPUT_DIM = 16
HIDDEN_DIM = 4
INTER_DIM = 10
INTER_LAYERS = 5

NUM_LAYERS = 2 * (INTER_LAYERS + 1)           # 12 linear layers
_NO_ACT = {INTER_LAYERS, NUM_LAYERS - 1}      # no tanh after layers 5 and 11

NUM_FUSED = NUM_LAYERS - 1                    # 11 layers after fusing 5 and 6
PAD = max(INPUT_DIM, INTER_DIM, HIDDEN_DIM)   # 16: uniform padded feature width
MAX_BLOCK_COLS = 2048                         # batch columns per grid step (cap)

# v7x has 2 TensorCores per chip; v5e/v6e have 1.  Used only to decide whether
# splitting the batch into >=2 blocks is worth the per-step overhead.
try:
    _NUM_TC = 2 if "v7" in jax.devices()[0].device_kind.lower() else 1
except Exception:  # pragma: no cover - be conservative if the query fails
    _NUM_TC = 1


def _layer_dims():
    enc = [INPUT_DIM] + [INTER_DIM] * INTER_LAYERS + [HIDDEN_DIM]
    dec = [INTER_DIM] * INTER_LAYERS + [INPUT_DIM]
    return enc + dec                          # length NUM_LAYERS + 1


def make_params(key):
    """PyTorch-style U(-1/sqrt(fan_in), 1/sqrt(fan_in)) init; W stored (in, out)."""
    dims = _layer_dims()
    params = []
    for i in range(NUM_LAYERS):
        fan_in, fan_out = dims[i], dims[i + 1]
        key, kw, kb = jax.random.split(key, 3)
        bound = 1.0 / math.sqrt(fan_in)
        W = jax.random.uniform(kw, (fan_in, fan_out), jnp.float32, -bound, bound)
        b = jax.random.uniform(kb, (1, fan_out), jnp.float32, -bound, bound)
        params.extend([W, b])
    return params


def pack_params(params):
    """Fuse layers 5+6 (no activation between them), transpose, pad, stack.

    Returns:
      w_stack: (NUM_FUSED, PAD, PAD)  holding W_i^T zero-padded (out, in) layout
      b_stack: (NUM_FUSED, PAD, 1)    holding b_i^T zero-padded column biases
    """
    Ws = [params[2 * i] for i in range(NUM_LAYERS)]       # (in, out)
    bs = [params[2 * i + 1] for i in range(NUM_LAYERS)]   # (1, out)
    hi = jax.lax.Precision.HIGHEST            # exact offline fusion in full f32
    W56 = jnp.dot(Ws[5], Ws[6], precision=hi)
    b56 = jnp.dot(bs[5], Ws[6], precision=hi) + bs[6]
    fW = Ws[:5] + [W56] + Ws[7:]
    fb = bs[:5] + [b56] + bs[7:]

    w_stack = jnp.stack([
        jnp.zeros((PAD, PAD), jnp.float32)
           .at[: W.shape[1], : W.shape[0]].set(W.T)        # (out, in), padded
        for W in fW
    ])                                        # (11, 16, 16)
    b_stack = jnp.stack([
        jnp.zeros((PAD, 1), jnp.float32).at[: b.shape[1], :].set(b.T)
        for b in fb
    ])                                        # (11, 16, 1)
    return w_stack, b_stack


def ae_kernel(x_ref, w_ref, b_ref, out_ref):
    """x_ref/out_ref: (PAD, BLOCK_COLS); w_ref: (11,16,16); b_ref: (11,16,1).

    Batch rides the lane axis -> every vreg lane is live, tanh and the final
    store are full-width.  The 11-layer chain is a static Python unroll of
    MXU dots (bias add on the VPU, tanh on the EUP's own VLIW slot).
    """
    h = x_ref[...]                            # (16, BC) f32, lane-dense
    for i in range(NUM_FUSED):                # static unroll: 11 serial MXU dots
        h = jnp.dot(w_ref[i], h, preferred_element_type=jnp.float32) + b_ref[i]
        if i != NUM_FUSED - 1:                # tanh after all but the last layer
            h = jnp.tanh(h)
    out_ref[...] = h.astype(out_ref.dtype)


def _choose_block_cols(B: int, num_cores: int) -> int:
    """Pick the lane-block width (static, B is a compile-time shape)."""
    if num_cores > 1 and B % (128 * num_cores) == 0:
        # v7x: give every TensorCore at least one 128-multiple block.
        return min(MAX_BLOCK_COLS, B // num_cores)
    if B <= MAX_BLOCK_COLS:
        return B            # single whole-array block: zero per-step overhead
    return MAX_BLOCK_COLS   # large batch: 2048-wide lane-dense tiles


@jax.jit
def ae_forward(x, w_stack, b_stack):
    B, D = x.shape
    assert D == INPUT_DIM, (B, D)
    bc = _choose_block_cols(B, _NUM_TC)
    grid = (pl.cdiv(B, bc),)                  # ragged tail handled by Pallas masking
    xT = x.T                                  # (16, B): batch on the lane axis

    outT = pl.pallas_call(
        ae_kernel,
        out_shape=jax.ShapeDtypeStruct((PAD, B), jnp.float32),
        grid=grid,
        in_specs=[
            pl.BlockSpec((PAD, bc), lambda i: (0, i)),
            # Constant index maps: weights/biases are DMA'd once and stay resident.
            pl.BlockSpec((NUM_FUSED, PAD, PAD), lambda i: (0, 0, 0)),
            pl.BlockSpec((NUM_FUSED, PAD, 1), lambda i: (0, 0, 0)),
        ],
        out_specs=pl.BlockSpec((PAD, bc), lambda i: (0, i)),
        compiler_params=pltpu.CompilerParams(
            dimension_semantics=("parallel",)),   # batch blocks are independent
    )(xT, w_stack, b_stack)
    return outT.T                             # back to caller layout (B, 16)


def ae_reference(x, params):
    """Pure-JAX reference mirroring the PyTorch forward exactly (unfused, unpadded)."""
    h = x
    for i in range(NUM_LAYERS):
        W = params[2 * i]
        b = params[2 * i + 1]
        h = h @ W + b
        if i not in _NO_ACT:
            h = jnp.tanh(h)
    return h


if __name__ == "__main__":
    key = jax.random.PRNGKey(0)
    key, xkey = jax.random.split(key)
    BATCH = 256                               # small demo batch (one lane-dense block)
    x = jax.random.normal(xkey, (BATCH, INPUT_DIM), dtype=jnp.float32)
    params = make_params(key)
    w_stack, b_stack = pack_params(params)

    out = ae_forward(x, w_stack, b_stack)
    out = jax.block_until_ready(out)

    ref = ae_reference(x, params)
    assert out.shape == (BATCH, INPUT_DIM), out.shape
    err = float(jnp.max(jnp.abs(out - ref)))
    assert err < 2e-4, f"max abs err = {err}"
    print("KERNEL_OK")
</pallas_src>

<mosaic_0001>
module attributes {stable_mosaic.version = 11 : i64} {
  func.func @ae_kernel(%arg0: i32, %arg1: memref<16x256xf32, #tpu.memory_space<vmem>>, %arg2: memref<11x16x16xf32, #tpu.memory_space<vmem>>, %arg3: memref<11x16x1xf32, #tpu.memory_space<vmem>>, %arg4: memref<16x256xf32, #tpu.memory_space<vmem>>) attributes {dimension_semantics = [#tpu.dimension_semantics<parallel>], iteration_bounds = array<i64: 1>, scalar_prefetch = 0 : i64, scratch_operands = 0 : i64, tpu.core_type = #tpu.core_type<tc>, window_params = [{transform_indices = @transform_0, window_bounds = array<i64: 16, 256>}, {pipeline_mode = #tpu.pipeline_mode<synchronous>, transform_indices = @transform_1, window_bounds = array<i64: 11, 16, 16>}, {pipeline_mode = #tpu.pipeline_mode<synchronous>, transform_indices = @transform_2, window_bounds = array<i64: 11, 16, 1>}, {transform_indices = @transform_3, window_bounds = array<i64: 16, 256>}]} {
    %c0 = arith.constant 0 : index
    %c0_0 = arith.constant 0 : index
    %0 = vector.load %arg1[%c0, %c0_0] : memref<16x256xf32, #tpu.memory_space<vmem>>, vector<16x256xf32>
    %c0_1 = arith.constant 0 : index
    %c0_2 = arith.constant 0 : index
    %c0_3 = arith.constant 0 : index
    %1 = vector.load %arg2[%c0_1, %c0_2, %c0_3] : memref<11x16x16xf32, #tpu.memory_space<vmem>>, vector<1x16x16xf32>
    %2 = vector.shape_cast %1 : vector<1x16x16xf32> to vector<16x16xf32>
    %cst = arith.constant dense<0.000000e+00> : vector<16x256xf32>
    %3 = tpu.matmul %2, %0, %cst {dimension_numbers = #tpu.dot_dimension_numbers<[1], [0], [0], [1], [0, 0, 1, 1], [], []>} : vector<16x16xf32>, vector<16x256xf32>, vector<16x256xf32> -> vector<16x256xf32>
    %c0_4 = arith.constant 0 : index
    %c0_5 = arith.constant 0 : index
    %c0_6 = arith.constant 0 : index
    %4 = vector.load %arg3[%c0_4, %c0_5, %c0_6] : memref<11x16x1xf32, #tpu.memory_space<vmem>>, vector<1x16x1xf32>
    %5 = vector.shape_cast %4 : vector<1x16x1xf32> to vector<16x1xf32>
    %6 = vector.broadcast %5 : vector<16x1xf32> to vector<16x256xf32>
    %7 = arith.addf %3, %6 : vector<16x256xf32>
    %8 = math.tanh %7 : vector<16x256xf32>
    %c1 = arith.constant 1 : index
    %c0_7 = arith.constant 0 : index
    %c0_8 = arith.constant 0 : index
    %9 = vector.load %arg2[%c1, %c0_7, %c0_8] : memref<11x16x16xf32, #tpu.memory_space<vmem>>, vector<1x16x16xf32>
    %10 = vector.shape_cast %9 : vector<1x16x16xf32> to vector<16x16xf32>
    %cst_9 = arith.constant dense<0.000000e+00> : vector<16x256xf32>
    %11 = tpu.matmul %10, %8, %cst_9 {dimension_numbers = #tpu.dot_dimension_numbers<[1], [0], [0], [1], [0, 0, 1, 1], [], []>} : vector<16x16xf32>, vector<16x256xf32>, vector<16x256xf32> -> vector<16x256xf32>
    %c1_10 = arith.constant 1 : index
    %c0_11 = arith.constant 0 : index
    %c0_12 = arith.constant 0 : index
    %12 = vector.load %arg3[%c1_10, %c0_11, %c0_12] : memref<11x16x1xf32, #tpu.memory_space<vmem>>, vector<1x16x1xf32>
    %13 = vector.shape_cast %12 : vector<1x16x1xf32> to vector<16x1xf32>
    %14 = vector.broadcast %13 : vector<16x1xf32> to vector<16x256xf32>
    %15 = arith.addf %11, %14 : vector<16x256xf32>
    %16 = math.tanh %15 : vector<16x256xf32>
    %c2 = arith.constant 2 : index
    %c0_13 = arith.constant 0 : index
    %c0_14 = arith.constant 0 : index
    %17 = vector.load %arg2[%c2, %c0_13, %c0_14] : memref<11x16x16xf32, #tpu.memory_space<vmem>>, vector<1x16x16xf32>
    %18 = vector.shape_cast %17 : vector<1x16x16xf32> to vector<16x16xf32>
    %cst_15 = arith.constant dense<0.000000e+00> : vector<16x256xf32>
    %19 = tpu.matmul %18, %16, %cst_15 {dimension_numbers = #tpu.dot_dimension_numbers<[1], [0], [0], [1], [0, 0, 1, 1], [], []>} : vector<16x16xf32>, vector<16x256xf32>, vector<16x256xf32> -> vector<16x256xf32>
    %c2_16 = arith.constant 2 : index
    %c0_17 = arith.constant 0 : index
    %c0_18 = arith.constant 0 : index
    %20 = vector.load %arg3[%c2_16, %c0_17, %c0_18] : memref<11x16x1xf32, #tpu.memory_space<vmem>>, vector<1x16x1xf32>
    %21 = vector.shape_cast %20 : vector<1x16x1xf32> to vector<16x1xf32>
    %22 = vector.broadcast %21 : vector<16x1xf32> to vector<16x256xf32>
    %23 = arith.addf %19, %22 : vector<16x256xf32>
    %24 = math.tanh %23 : vector<16x256xf32>
    %c3 = arith.constant 3 : index
    %c0_19 = arith.constant 0 : index
    %c0_20 = arith.constant 0 : index
    %25 = vector.load %arg2[%c3, %c0_19, %c0_20] : memref<11x16x16xf32, #tpu.memory_space<vmem>>, vector<1x16x16xf32>
    %26 = vector.shape_cast %25 : vector<1x16x16xf32> to vector<16x16xf32>
    %cst_21 = arith.constant dense<0.000000e+00> : vector<16x256xf32>
    %27 = tpu.matmul %26, %24, %cst_21 {dimension_numbers = #tpu.dot_dimension_numbers<[1], [0], [0], [1], [0, 0, 1, 1], [], []>} : vector<16x16xf32>, vector<16x256xf32>, vector<16x256xf32> -> vector<16x256xf32>
    %c3_22 = arith.constant 3 : index
    %c0_23 = arith.constant 0 : index
    %c0_24 = arith.constant 0 : index
    %28 = vector.load %arg3[%c3_22, %c0_23, %c0_24] : memref<11x16x1xf32, #tpu.memory_space<vmem>>, vector<1x16x1xf32>
    %29 = vector.shape_cast %28 : vector<1x16x1xf32> to vector<16x1xf32>
    %30 = vector.broadcast %29 : vector<16x1xf32> to vector<16x256xf32>
    %31 = arith.addf %27, %30 : vector<16x256xf32>
    %32 = math.tanh %31 : vector<16x256xf32>
    %c4 = arith.constant 4 : index
    %c0_25 = arith.constant 0 : index
    %c0_26 = arith.constant 0 : index
    %33 = vector.load %arg2[%c4, %c0_25, %c0_26] : memref<11x16x16xf32, #tpu.memory_space<vmem>>, vector<1x16x16xf32>
    %34 = vector.shape_cast %33 : vector<1x16x16xf32> to vector<16x16xf32>
    %cst_27 = arith.constant dense<0.000000e+00> : vector<16x256xf32>
    %35 = tpu.matmul %34, %32, %cst_27 {dimension_numbers = #tpu.dot_dimension_numbers<[1], [0], [0], [1], [0, 0, 1, 1], [], []>} : vector<16x16xf32>, vector<16x256xf32>, vector<16x256xf32> -> vector<16x256xf32>
    %c4_28 = arith.constant 4 : index
    %c0_29 = arith.constant 0 : index
    %c0_30 = arith.constant 0 : index
    %36 = vector.load %arg3[%c4_28, %c0_29, %c0_30] : memref<11x16x1xf32, #tpu.memory_space<vmem>>, vector<1x16x1xf32>
    %37 = vector.shape_cast %36 : vector<1x16x1xf32> to vector<16x1xf32>
    %38 = vector.broadcast %37 : vector<16x1xf32> to vector<16x256xf32>
    %39 = arith.addf %35, %38 : vector<16x256xf32>
    %40 = math.tanh %39 : vector<16x256xf32>
    %c5 = arith.constant 5 : index
    %c0_31 = arith.constant 0 : index
    %c0_32 = arith.constant 0 : index
    %41 = vector.load %arg2[%c5, %c0_31, %c0_32] : memref<11x16x16xf32, #tpu.memory_space<vmem>>, vector<1x16x16xf32>
    %42 = vector.shape_cast %41 : vector<1x16x16xf32> to vector<16x16xf32>
    %cst_33 = arith.constant dense<0.000000e+00> : vector<16x256xf32>
    %43 = tpu.matmul %42, %40, %cst_33 {dimension_numbers = #tpu.dot_dimension_numbers<[1], [0], [0], [1], [0, 0, 1, 1], [], []>} : vector<16x16xf32>, vector<16x256xf32>, vector<16x256xf32> -> vector<16x256xf32>
    %c5_34 = arith.constant 5 : index
    %c0_35 = arith.constant 0 : index
    %c0_36 = arith.constant 0 : index
    %44 = vector.load %arg3[%c5_34, %c0_35, %c0_36] : memref<11x16x1xf32, #tpu.memory_space<vmem>>, vector<1x16x1xf32>
    %45 = vector.shape_cast %44 : vector<1x16x1xf32> to vector<16x1xf32>
    %46 = vector.broadcast %45 : vector<16x1xf32> to vector<16x256xf32>
    %47 = arith.addf %43, %46 : vector<16x256xf32>
    %48 = math.tanh %47 : vector<16x256xf32>
    %c6 = arith.constant 6 : index
    %c0_37 = arith.constant 0 : index
    %c0_38 = arith.constant 0 : index
    %49 = vector.load %arg2[%c6, %c0_37, %c0_38] : memref<11x16x16xf32, #tpu.memory_space<vmem>>, vector<1x16x16xf32>
    %50 = vector.shape_cast %49 : vector<1x16x16xf32> to vector<16x16xf32>
    %cst_39 = arith.constant dense<0.000000e+00> : vector<16x256xf32>
    %51 = tpu.matmul %50, %48, %cst_39 {dimension_numbers = #tpu.dot_dimension_numbers<[1], [0], [0], [1], [0, 0, 1, 1], [], []>} : vector<16x16xf32>, vector<16x256xf32>, vector<16x256xf32> -> vector<16x256xf32>
    %c6_40 = arith.constant 6 : index
    %c0_41 = arith.constant 0 : index
    %c0_42 = arith.constant 0 : index
    %52 = vector.load %arg3[%c6_40, %c0_41, %c0_42] : memref<11x16x1xf32, #tpu.memory_space<vmem>>, vector<1x16x1xf32>
    %53 = vector.shape_cast %52 : vector<1x16x1xf32> to vector<16x1xf32>
    %54 = vector.broadcast %53 : vector<16x1xf32> to vector<16x256xf32>
    %55 = arith.addf %51, %54 : vector<16x256xf32>
    %56 = math.tanh %55 : vector<16x256xf32>
    %c7 = arith.constant 7 : index
    %c0_43 = arith.constant 0 : index
    %c0_44 = arith.constant 0 : index
    %57 = vector.load %arg2[%c7, %c0_43, %c0_44] : memref<11x16x16xf32, #tpu.memory_space<vmem>>, vector<1x16x16xf32>
    %58 = vector.shape_cast %57 : vector<1x16x16xf32> to vector<16x16xf32>
    %cst_45 = arith.constant dense<0.000000e+00> : vector<16x256xf32>
    %59 = tpu.matmul %58, %56, %cst_45 {dimension_numbers = #tpu.dot_dimension_numbers<[1], [0], [0], [1], [0, 0, 1, 1], [], []>} : vector<16x16xf32>, vector<16x256xf32>, vector<16x256xf32> -> vector<16x256xf32>
    %c7_46 = arith.constant 7 : index
    %c0_47 = arith.constant 0 : index
    %c0_48 = arith.constant 0 : index
    %60 = vector.load %arg3[%c7_46, %c0_47, %c0_48] : memref<11x16x1xf32, #tpu.memory_space<vmem>>, vector<1x16x1xf32>
    %61 = vector.shape_cast %60 : vector<1x16x1xf32> to vector<16x1xf32>
    %62 = vector.broadcast %61 : vector<16x1xf32> to vector<16x256xf32>
    %63 = arith.addf %59, %62 : vector<16x256xf32>
    %64 = math.tanh %63 : vector<16x256xf32>
    %c8 = arith.constant 8 : index
    %c0_49 = arith.constant 0 : index
    %c0_50 = arith.constant 0 : index
    %65 = vector.load %arg2[%c8, %c0_49, %c0_50] : memref<11x16x16xf32, #tpu.memory_space<vmem>>, vector<1x16x16xf32>
    %66 = vector.shape_cast %65 : vector<1x16x16xf32> to vector<16x16xf32>
    %cst_51 = arith.constant dense<0.000000e+00> : vector<16x256xf32>
    %67 = tpu.matmul %66, %64, %cst_51 {dimension_numbers = #tpu.dot_dimension_numbers<[1], [0], [0], [1], [0, 0, 1, 1], [], []>} : vector<16x16xf32>, vector<16x256xf32>, vector<16x256xf32> -> vector<16x256xf32>
    %c8_52 = arith.constant 8 : index
    %c0_53 = arith.constant 0 : index
    %c0_54 = arith.constant 0 : index
    %68 = vector.load %arg3[%c8_52, %c0_53, %c0_54] : memref<11x16x1xf32, #tpu.memory_space<vmem>>, vector<1x16x1xf32>
    %69 = vector.shape_cast %68 : vector<1x16x1xf32> to vector<16x1xf32>
    %70 = vector.broadcast %69 : vector<16x1xf32> to vector<16x256xf32>
    %71 = arith.addf %67, %70 : vector<16x256xf32>
    %72 = math.tanh %71 : vector<16x256xf32>
    %c9 = arith.constant 9 : index
    %c0_55 = arith.constant 0 : index
    %c0_56 = arith.constant 0 : index
    %73 = vector.load %arg2[%c9, %c0_55, %c0_56] : memref<11x16x16xf32, #tpu.memory_space<vmem>>, vector<1x16x16xf32>
    %74 = vector.shape_cast %73 : vector<1x16x16xf32> to vector<16x16xf32>
    %cst_57 = arith.constant dense<0.000000e+00> : vector<16x256xf32>
    %75 = tpu.matmul %74, %72, %cst_57 {dimension_numbers = #tpu.dot_dimension_numbers<[1], [0], [0], [1], [0, 0, 1, 1], [], []>} : vector<16x16xf32>, vector<16x256xf32>, vector<16x256xf32> -> vector<16x256xf32>
    %c9_58 = arith.constant 9 : index
    %c0_59 = arith.constant 0 : index
    %c0_60 = arith.constant 0 : index
    %76 = vector.load %arg3[%c9_58, %c0_59, %c0_60] : memref<11x16x1xf32, #tpu.memory_space<vmem>>, vector<1x16x1xf32>
    %77 = vector.shape_cast %76 : vector<1x16x1xf32> to vector<16x1xf32>
    %78 = vector.broadcast %77 : vector<16x1xf32> to vector<16x256xf32>
    %79 = arith.addf %75, %78 : vector<16x256xf32>
    %80 = math.tanh %79 : vector<16x256xf32>
    %c10 = arith.constant 10 : index
    %c0_61 = arith.constant 0 : index
    %c0_62 = arith.constant 0 : index
    %81 = vector.load %arg2[%c10, %c0_61, %c0_62] : memref<11x16x16xf32, #tpu.memory_space<vmem>>, vector<1x16x16xf32>
    %82 = vector.shape_cast %81 : vector<1x16x16xf32> to vector<16x16xf32>
    %cst_63 = arith.constant dense<0.000000e+00> : vector<16x256xf32>
    %83 = tpu.matmul %82, %80, %cst_63 {dimension_numbers = #tpu.dot_dimension_numbers<[1], [0], [0], [1], [0, 0, 1, 1], [], []>} : vector<16x16xf32>, vector<16x256xf32>, vector<16x256xf32> -> vector<16x256xf32>
    %c10_64 = arith.constant 10 : index
    %c0_65 = arith.constant 0 : index
    %c0_66 = arith.constant 0 : index
    %84 = vector.load %arg3[%c10_64, %c0_65, %c0_66] : memref<11x16x1xf32, #tpu.memory_space<vmem>>, vector<1x16x1xf32>
    %85 = vector.shape_cast %84 : vector<1x16x1xf32> to vector<16x1xf32>
    %86 = vector.broadcast %85 : vector<16x1xf32> to vector<16x256xf32>
    %87 = arith.addf %83, %86 : vector<16x256xf32>
    %c0_67 = arith.constant 0 : index
    %c0_68 = arith.constant 0 : index
    %88 = vector.load %arg4[%c0_67, %c0_68] : memref<16x256xf32, #tpu.memory_space<vmem>>, vector<16x256xf32>
    tpu.vector_store %arg4[%c0_67, %c0_68], %87 {strides = array<i32>} : memref<16x256xf32, #tpu.memory_space<vmem>>, vector<16x256xf32>,
    return
  }
  func.func @transform_0(%arg0: i32) -> (i32, i32) {
    %c0_i32 = arith.constant 0 : i32
    %c0_i32_0 = arith.constant 0 : i32
    return %c0_i32, %arg0 : i32, i32
  }
  func.func @transform_1(%arg0: i32) -> (i32, i32, i32) {
    %c0_i32 = arith.constant 0 : i32
    %c0_i32_0 = arith.constant 0 : i32
    %c0_i32_1 = arith.constant 0 : i32
    %c0_i32_2 = arith.constant 0 : i32
    return %c0_i32, %c0_i32_0, %c0_i32_1 : i32, i32, i32
  }
  func.func @transform_2(%arg0: i32) -> (i32, i32, i32) {
    %c0_i32 = arith.constant 0 : i32
    %c0_i32_0 = arith.constant 0 : i32
    %c0_i32_1 = arith.constant 0 : i32
    %c0_i32_2 = arith.constant 0 : i32
    return %c0_i32, %c0_i32_0, %c0_i32_1 : i32, i32, i32
  }
  func.func @transform_3(%arg0: i32) -> (i32, i32) {
    %c0_i32 = arith.constant 0 : i32
    %c0_i32_0 = arith.constant 0 : i32
    return %c0_i32, %arg0 : i32, i32
  }
}

</mosaic_0001>

<llo_original>
// kernel: ae_forward.1
$region0: #{ae_forward.1}
  #allocation0 [shape = 'u32[]', space=smem, size = 0x4, offset = 0x4, fixed_abs, tag = 'smem constant byte address 0x4 - core index']
  #allocation1 [shape = 'u32[72,128]{1,0:T(1,128)}', space=vmem, size = 0x9000, scoped, tag = 'internal scratch']
  %s0 = inlined_call_operand.hbm [shape: f32[16,256], index: 0, kind: input, shape index: {}]
  %s1 = inlined_call_operand.vmem [shape: f32[11,16,16], index: 1, kind: input, shape index: {}]
  %s2 = inlined_call_operand.vmem [shape: f32[11,16,1], index: 2, kind: input, shape index: {}]
  %s3 = inlined_call_operand.hbm [shape: f32[16,256], index: 3, kind: output, shape index: {}]
  %s4 = sld [smem:[#allocation0]]
  $region26: #{ae_forward.1} parent=0
    _
  %s6 = ssub.s32 1, %s4
  %s7 = scalar_select 0, %s6, %s4
  $region1: #{ae_forward.1} parent=0
    #allocation2 [shape = 'u8[16384]{0}', space=vmem, size = 0x4000, scoped, tag = 'input window, operand 0, single buffered']
    #allocation3 [shape = 's32[1]{0}', space=sflag, size = 0x4, scoped, tag = 'scoped memory for ae_forward.1']
    #allocation4 [shape = 's32[1]{0}', space=sflag, size = 0x4, scoped, tag = 'scoped memory for ae_forward.1']
    #allocation5 [shape = 'u8[16384]{0}', space=vmem, size = 0x4000, scoped, tag = 'output window, operand 0, single buffered']
    %8 = vsyncpa [#allocation3], 0
    %9 = vsyncpa [#allocation4], 0
    // Predicated region
    $region2: #{ae_forward.1} parent=1 // pred_check
      _
    $region3: #{ae_forward.1} parent=1 // pred_check_branch
      %11 = sbr.rel (0) target = $region5
    $region4: #{ae_forward.1} parent=1 // pred_region
      %13 = vsyncadd [#allocation3], 0
      %s14 = sshll.u32 %s0, 4
      %s15 = int_to_ptr.hbm [resolvable:$true] %s14
      %s16 = sshll.u32 [#allocation2], 4
      %s17 = int_to_ptr.vmem [resolvable:$true] %s16
      %22 = dma.hbm_to_vmem [thread:$0]  %s15, 512, %s17, [#allocation3], 256, 256, 16
    $region5: #{ae_forward.1} parent=1 // pred_fallthru
      _
    // Predicated region
    $region6: #{ae_forward.1} parent=1 // pred_check
      _
    $region7: #{ae_forward.1} parent=1 // pred_check_branch
      %24 = sbr.rel (0) target = $region9
    $region8: #{ae_forward.1} parent=1 // pred_region
      _
    $region9: #{ae_forward.1} parent=1 // pred_fallthru
      _
    // Predicated region
    $region10: #{ae_forward.1} parent=1 // pred_check
      _
    $region11: #{ae_forward.1} parent=1 // pred_check_branch
      %26 = sbr.rel (0) target = $region13
    $region12: #{ae_forward.1} parent=1 // pred_region
      _
    $region13: #{ae_forward.1} parent=1 // pred_fallthru
      _
    // Predicated region
    $region14: #{ae_forward.1} parent=1 // pred_check
      _
    $region15: #{ae_forward.1} parent=1 // pred_check_branch
      %28 = sbr.rel (0) target = $region17
    $region16: #{ae_forward.1} parent=1 // pred_region
      %30 = dma.done [#allocation3], 512
    $region17: #{ae_forward.1} parent=1 // pred_fallthru
      _
    %v31 = vld [vmem:[#allocation2] sm:$0xff]
    %v32 = vld [vmem:[#allocation2 + $0x8] sm:$0xff]
    %v33 = vld [vmem:[#allocation2 + $0x10] sm:$0xff]
    %v34 = vld [vmem:[#allocation2 + $0x18] sm:$0xff]
    %v35 = vld [vmem:[%s1] sm:$0xff]
    %v36 = vld [vmem:[%s1 + $0x8] sm:$0xff]
    %v37 = vld [vmem:[%s2] sm:$0xff]
    %v38 = vld [vmem:[%s2 + $0x8] sm:$0xff]
    %40 = vset.pattern.permute.xlu0 0
    %41 = vperm.xlu0 %40, %v37
    %v42 = vpop.permute.xlu0 %41
    %45 = vset.pattern.permute.xlu0 0
    %46 = vperm.xlu0 %45, %v38
    %v47 = vpop.permute.xlu0 %46
    %vm49 = vcmask 130048
    %v51 = vsel %vm49, %v35, 0
    %v54 = vsel %vm49, %v36, 0
    %56 = vmatpush.msra.mxu0 0.0
    %57 = vmatpush.msra.mxu0 0.0
    %58 = vmatpush.msra.mxu0 0.0
    %59 = vmatpush.msra.mxu0 0.0
    %60 = vmatpush.msra.mxu0 0.0
    %61 = vmatpush.msra.mxu0 0.0
    %62 = vmatpush.msra.mxu0 0.0
    %63 = vmatpush.msra.mxu0 0.0
    %64 = vmatpush.msra.mxu0 0.0
    %65 = vmatpush.msra.mxu0 0.0
    %66 = vmatpush.msra.mxu0 0.0
    %67 = vmatpush.msra.mxu0 0.0
    %68 = vmatpush.msra.mxu0 0.0
    %69 = vmatpush.msra.mxu0 0.0
    %70 = vmatpush.msra.mxu0 %v33
    %71 = vmatpush.msra.mxu0 %v31
    %72 = vmatmul.f32.gmra.mxu0 %v51
    %v73 = vpop.f32.mrf.mxu0
    %v74 = vadd.f32 %v42, %v73
    %75 = vmatmul.f32.gmra.mxu0 %v54
    %v76 = vpop.f32.mrf.mxu0
    %v77 = vadd.f32 %v47, %v76
    %78 = vdwg.mxu0
    %79 = vmatpush.msra.mxu0 0.0
    %80 = vmatpush.msra.mxu0 0.0
    %81 = vmatpush.msra.mxu0 0.0
    %82 = vmatpush.msra.mxu0 0.0
    %83 = vmatpush.msra.mxu0 0.0
    %84 = vmatpush.msra.mxu0 0.0
    %85 = vmatpush.msra.mxu0 0.0
    %86 = vmatpush.msra.mxu0 0.0
    %87 = vmatpush.msra.mxu0 0.0
    %88 = vmatpush.msra.mxu0 0.0
    %89 = vmatpush.msra.mxu0 0.0
    %90 = vmatpush.msra.mxu0 0.0
    %91 = vmatpush.msra.mxu0 0.0
    %92 = vmatpush.msra.mxu0 0.0
    %93 = vmatpush.msra.mxu0 %v34
    %94 = vmatpush.msra.mxu0 %v32
    %95 = vmatmul.f32.gmra.mxu0 %v51
    %v96 = vpop.f32.mrf.mxu0
    %v97 = vadd.f32 %v42, %v96
    %98 = vmatmul.f32.gmra.mxu0 %v54
    %v99 = vpop.f32.mrf.mxu0
    %v100 = vadd.f32 %v47, %v99
    %101 = vdwg.mxu0
    %v102 = vtanh.pop %v74
    %v103 = vtanh.pop %v97
    %v104 = vtanh.pop %v77
    %v105 = vtanh.pop %v100
    %s106 = scalar_lea.vmem %s1, 16
    %v107 = vld [vmem:[%s106] sm:$0xff]
    %v108 = vld [vmem:[%s106 + $0x8] sm:$0xff]
    %s109 = scalar_lea.vmem %s2, 16
    %v110 = vld [vmem:[%s109] sm:$0xff]
    %v111 = vld [vmem:[%s109 + $0x8] sm:$0xff]
    %113 = vset.pattern.permute.xlu0 0
    %114 = vperm.xlu0 %113, %v110
    %v115 = vpop.permute.xlu0 %114
    %118 = vset.pattern.permute.xlu0 0
    %119 = vperm.xlu0 %118, %v111
    %v120 = vpop.permute.xlu0 %119
    %v123 = vsel %vm49, %v107, 0
    %v126 = vsel %vm49, %v108, 0
    %128 = vmatpush.msra.mxu0 0.0
    %129 = vmatpush.msra.mxu0 0.0
    %130 = vmatpush.msra.mxu0 0.0
    %131 = vmatpush.msra.mxu0 0.0
    %132 = vmatpush.msra.mxu0 0.0
    %133 = vmatpush.msra.mxu0 0.0
    %134 = vmatpush.msra.mxu0 0.0
    %135 = vmatpush.msra.mxu0 0.0
    %136 = vmatpush.msra.mxu0 0.0
    %137 = vmatpush.msra.mxu0 0.0
    %138 = vmatpush.msra.mxu0 0.0
    %139 = vmatpush.msra.mxu0 0.0
    %140 = vmatpush.msra.mxu0 0.0
    %141 = vmatpush.msra.mxu0 0.0
    %142 = vmatpush.msra.mxu0 %v104
    %143 = vmatpush.msra.mxu0 %v102
    %144 = vmatmul.f32.gmra.mxu0 %v123
    %v145 = vpop.f32.mrf.mxu0
    %v146 = vadd.f32 %v115, %v145
    %147 = vmatmul.f32.gmra.mxu0 %v126
    %v148 = vpop.f32.mrf.mxu0
    %v149 = vadd.f32 %v120, %v148
    %150 = vdwg.mxu0
    %151 = vmatpush.msra.mxu0 0.0
    %152 = vmatpush.msra.mxu0 0.0
    %153 = vmatpush.msra.mxu0 0.0
    %154 = vmatpush.msra.mxu0 0.0
    %155 = vmatpush.msra.mxu0 0.0
    %156 = vmatpush.msra.mxu0 0.0
    %157 = vmatpush.msra.mxu0 0.0
    %158 = vmatpush.msra.mxu0 0.0
    %159 = vmatpush.msra.mxu0 0.0
    %160 = vmatpush.msra.mxu0 0.0
    %161 = vmatpush.msra.mxu0 0.0
    %162 = vmatpush.msra.mxu0 0.0
    %163 = vmatpush.msra.mxu0 0.0
    %164 = vmatpush.msra.mxu0 0.0
    %165 = vmatpush.msra.mxu0 %v105
    %166 = vmatpush.msra.mxu0 %v103
    %167 = vmatmul.f32.gmra.mxu0 %v123
    %v168 = vpop.f32.mrf.mxu0
    %v169 = vadd.f32 %v115, %v168
    %170 = vmatmul.f32.gmra.mxu0 %v126
    %v171 = vpop.f32.mrf.mxu0
    %v172 = vadd.f32 %v120, %v171
    %173 = vdwg.mxu0
    %v174 = vtanh.pop %v146
    %v175 = vtanh.pop %v169
    %v176 = vtanh.pop %v149
    %v177 = vtanh.pop %v172
    %s178 = scalar_lea.vmem %s1, 32
    %v179 = vld [vmem:[%s178] sm:$0xff]
    %v180 = vld [vmem:[%s178 + $0x8] sm:$0xff]
    %s181 = scalar_lea.vmem %s2, 32
    %v182 = vld [vmem:[%s181] sm:$0xff]
    %v183 = vld [vmem:[%s181 + $0x8] sm:$0xff]
    %185 = vset.pattern.permute.xlu0 0
    %186 = vperm.xlu0 %185, %v182
    %v187 = vpop.permute.xlu0 %186
    %190 = vset.pattern.permute.xlu0 0
    %191 = vperm.xlu0 %190, %v183
    %v192 = vpop.permute.xlu0 %191
    %v195 = vsel %vm49, %v179, 0
    %v198 = vsel %vm49, %v180, 0
    %200 = vmatpush.msra.mxu0 0.0
    %201 = vmatpush.msra.mxu0 0.0
    %202 = vmatpush.msra.mxu0 0.0
    %203 = vmatpush.msra.mxu0 0.0
    %204 = vmatpush.msra.mxu0 0.0
    %205 = vmatpush.msra.mxu0 0.0
    %206 = vmatpush.msra.mxu0 0.0
    %207 = vmatpush.msra.mxu0 0.0
    %208 = vmatpush.msra.mxu0 0.0
    %209 = vmatpush.msra.mxu0 0.0
    %210 = vmatpush.msra.mxu0 0.0
    %211 = vmatpush.msra.mxu0 0.0
    %212 = vmatpush.msra.mxu0 0.0
    %213 = vmatpush.msra.mxu0 0.0
    %214 = vmatpush.msra.mxu0 %v176
    %215 = vmatpush.msra.mxu0 %v174
    %216 = vmatmul.f32.gmra.mxu0 %v195
    %v217 = vpop.f32.mrf.mxu0
    %v218 = vadd.f32 %v187, %v217
    %219 = vmatmul.f32.gmra.mxu0 %v198
    %v220 = vpop.f32.mrf.mxu0
    %v221 = vadd.f32 %v192, %v220
    %222 = vdwg.mxu0
    %223 = vmatpush.msra.mxu0 0.0
    %224 = vmatpush.msra.mxu0 0.0
    %225 = vmatpush.msra.mxu0 0.0
    %226 = vmatpush.msra.mxu0 0.0
    %227 = vmatpush.msra.mxu0 0.0
    %228 = vmatpush.msra.mxu0 0.0
    %229 = vmatpush.msra.mxu0 0.0
    %230 = vmatpush.msra.mxu0 0.0
    %231 = vmatpush.msra.mxu0 0.0
    %232 = vmatpush.msra.mxu0 0.0
    %233 = vmatpush.msra.mxu0 0.0
    %234 = vmatpush.msra.mxu0 0.0
    %235 = vmatpush.msra.mxu0 0.0
    %236 = vmatpush.msra.mxu0 0.0
    %237 = vmatpush.msra.mxu0 %v177
    %238 = vmatpush.msra.mxu0 %v175
    %239 = vmatmul.f32.gmra.mxu0 %v195
    %v240 = vpop.f32.mrf.mxu0
    %v241 = vadd.f32 %v187, %v240
    %242 = vmatmul.f32.gmra.mxu0 %v198
    %v243 = vpop.f32.mrf.mxu0
    %v244 = vadd.f32 %v192, %v243
    %245 = vdwg.mxu0
    %v246 = vtanh.pop %v218
    %v247 = vtanh.pop %v241
    %v248 = vtanh.pop %v221
    %v249 = vtanh.pop %v244
    %s250 = scalar_lea.vmem %s1, 48
    %v251 = vld [vmem:[%s250] sm:$0xff]
    %v252 = vld [vmem:[%s250 + $0x8] sm:$0xff]
    %s253 = scalar_lea.vmem %s2, 48
    %v254 = vld [vmem:[%s253] sm:$0xff]
    %v255 = vld [vmem:[%s253 + $0x8] sm:$0xff]
    %257 = vset.pattern.permute.xlu0 0
    %258 = vperm.xlu0 %257, %v254
    %v259 = vpop.permute.xlu0 %258
    %262 = vset.pattern.permute.xlu0 0
    %263 = vperm.xlu0 %262, %v255
    %v264 = vpop.permute.xlu0 %263
    %v267 = vsel %vm49, %v251, 0
    %v270 = vsel %vm49, %v252, 0
    %272 = vmatpush.msra.mxu0 0.0
    %273 = vmatpush.msra.mxu0 0.0
    %274 = vmatpush.msra.mxu0 0.0
    %275 = vmatpush.msra.mxu0 0.0
    %276 = vmatpush.msra.mxu0 0.0
    %277 = vmatpush.msra.mxu0 0.0
    %278 = vmatpush.msra.mxu0 0.0
    %279 = vmatpush.msra.mxu0 0.0
    %280 = vmatpush.msra.mxu0 0.0
    %281 = vmatpush.msra.mxu0 0.0
    %282 = vmatpush.msra.mxu0 0.0
    %283 = vmatpush.msra.mxu0 0.0
    %284 = vmatpush.msra.mxu0 0.0
    %285 = vmatpush.msra.mxu0 0.0
    %286 = vmatpush.msra.mxu0 %v248
    %287 = vmatpush.msra.mxu0 %v246
    %288 = vmatmul.f32.gmra.mxu0 %v267
    %v289 = vpop.f32.mrf.mxu0
    %v290 = vadd.f32 %v259, %v289
    %291 = vmatmul.f32.gmra.mxu0 %v270
    %v292 = vpop.f32.mrf.mxu0
    %v293 = vadd.f32 %v264, %v292
    %294 = vdwg.mxu0
    %295 = vmatpush.msra.mxu0 0.0
    %296 = vmatpush.msra.mxu0 0.0
    %297 = vmatpush.msra.mxu0 0.0
    %298 = vmatpush.msra.mxu0 0.0
    %299 = vmatpush.msra.mxu0 0.0
    %300 = vmatpush.msra.mxu0 0.0
    %301 = vmatpush.msra.mxu0 0.0
    %302 = vmatpush.msra.mxu0 0.0
    %303 = vmatpush.msra.mxu0 0.0
    %304 = vmatpush.msra.mxu0 0.0
    %305 = vmatpush.msra.mxu0 0.0
    %306 = vmatpush.msra.mxu0 0.0
    %307 = vmatpush.msra.mxu0 0.0
    %308 = vmatpush.msra.mxu0 0.0
    %309 = vmatpush.msra.mxu0 %v249
    %310 = vmatpush.msra.mxu0 %v247
    %311 = vmatmul.f32.gmra.mxu0 %v267
    %v312 = vpop.f32.mrf.mxu0
    %v313 = vadd.f32 %v259, %v312
    %314 = vmatmul.f32.gmra.mxu0 %v270
    %v315 = vpop.f32.mrf.mxu0
    %v316 = vadd.f32 %v264, %v315
    %317 = vdwg.mxu0
    %v318 = vtanh.pop %v290
    %v319 = vtanh.pop %v313
    %v320 = vtanh.pop %v293
    %v321 = vtanh.pop %v316
    %s322 = scalar_lea.vmem %s1, 64
    %v323 = vld [vmem:[%s322] sm:$0xff]
    %v324 = vld [vmem:[%s322 + $0x8] sm:$0xff]
    %s325 = scalar_lea.vmem %s2, 64
    %v326 = vld [vmem:[%s325] sm:$0xff]
    %v327 = vld [vmem:[%s325 + $0x8] sm:$0xff]
    %329 = vset.pattern.permute.xlu0 0
    %330 = vperm.xlu0 %329, %v326
    %v331 = vpop.permute.xlu0 %330
    %334 = vset.pattern.permute.xlu0 0
    %335 = vperm.xlu0 %334, %v327
    %v336 = vpop.permute.xlu0 %335
    %v339 = vsel %vm49, %v323, 0
    %v342 = vsel %vm49, %v324, 0
    %344 = vmatpush.msra.mxu0 0.0
    %345 = vmatpush.msra.mxu0 0.0
    %346 = vmatpush.msra.mxu0 0.0
    %347 = vmatpush.msra.mxu0 0.0
    %348 = vmatpush.msra.mxu0 0.0
    %349 = vmatpush.msra.mxu0 0.0
    %350 = vmatpush.msra.mxu0 0.0
    %351 = vmatpush.msra.mxu0 0.0
    %352 = vmatpush.msra.mxu0 0.0
    %353 = vmatpush.msra.mxu0 0.0
    %354 = vmatpush.msra.mxu0 0.0
    %355 = vmatpush.msra.mxu0 0.0
    %356 = vmatpush.msra.mxu0 0.0
    %357 = vmatpush.msra.mxu0 0.0
    %358 = vmatpush.msra.mxu0 %v320
    %359 = vmatpush.msra.mxu0 %v318
    %360 = vmatmul.f32.gmra.mxu0 %v339
    %v361 = vpop.f32.mrf.mxu0
    %v362 = vadd.f32 %v331, %v361
    %363 = vmatmul.f32.gmra.mxu0 %v342
    %v364 = vpop.f32.mrf.mxu0
    %v365 = vadd.f32 %v336, %v364
    %366 = vdwg.mxu0
    %367 = vmatpush.msra.mxu0 0.0
    %368 = vmatpush.msra.mxu0 0.0
    %369 = vmatpush.msra.mxu0 0.0
    %370 = vmatpush.msra.mxu0 0.0
    %371 = vmatpush.msra.mxu0 0.0
    %372 = vmatpush.msra.mxu0 0.0
    %373 = vmatpush.msra.mxu0 0.0
    %374 = vmatpush.msra.mxu0 0.0
    %375 = vmatpush.msra.mxu0 0.0
    %376 = vmatpush.msra.mxu0 0.0
    %377 = vmatpush.msra.mxu0 0.0
    %378 = vmatpush.msra.mxu0 0.0
    %379 = vmatpush.msra.mxu0 0.0
    %380 = vmatpush.msra.mxu0 0.0
    %381 = vmatpush.msra.mxu0 %v321
    %382 = vmatpush.msra.mxu0 %v319
    %383 = vmatmul.f32.gmra.mxu0 %v339
    %v384 = vpop.f32.mrf.mxu0
    %v385 = vadd.f32 %v331, %v384
    %386 = vmatmul.f32.gmra.mxu0 %v342
    %v387 = vpop.f32.mrf.mxu0
    %v388 = vadd.f32 %v336, %v387
    %389 = vdwg.mxu0
    %v390 = vtanh.pop %v362
    %v391 = vtanh.pop %v385
    %v392 = vtanh.pop %v365
    %v393 = vtanh.pop %v388
    %s394 = scalar_lea.vmem %s1, 80
    %v395 = vld [vmem:[%s394] sm:$0xff]
    %v396 = vld [vmem:[%s394 + $0x8] sm:$0xff]
    %s397 = scalar_lea.vmem %s2, 80
    %v398 = vld [vmem:[%s397] sm:$0xff]
    %v399 = vld [vmem:[%s397 + $0x8] sm:$0xff]
    %401 = vset.pattern.permute.xlu0 0
    %402 = vperm.xlu0 %401, %v398
    %v403 = vpop.permute.xlu0 %402
    %406 = vset.pattern.permute.xlu0 0
    %407 = vperm.xlu0 %406, %v399
    %v408 = vpop.permute.xlu0 %407
    %v411 = vsel %vm49, %v395, 0
    %v414 = vsel %vm49, %v396, 0
    %416 = vmatpush.msra.mxu0 0.0
    %417 = vmatpush.msra.mxu0 0.0
    %418 = vmatpush.msra.mxu0 0.0
    %419 = vmatpush.msra.mxu0 0.0
    %420 = vmatpush.msra.mxu0 0.0
    %421 = vmatpush.msra.mxu0 0.0
    %422 = vmatpush.msra.mxu0 0.0
    %423 = vmatpush.msra.mxu0 0.0
    %424 = vmatpush.msra.mxu0 0.0
    %425 = vmatpush.msra.mxu0 0.0
    %426 = vmatpush.msra.mxu0 0.0
    %427 = vmatpush.msra.mxu0 0.0
    %428 = vmatpush.msra.mxu0 0.0
    %429 = vmatpush.msra.mxu0 0.0
    %430 = vmatpush.msra.mxu0 %v392
    %431 = vmatpush.msra.mxu0 %v390
    %432 = vmatmul.f32.gmra.mxu0 %v411
    %v433 = vpop.f32.mrf.mxu0
    %v434 = vadd.f32 %v403, %v433
    %435 = vmatmul.f32.gmra.mxu0 %v414
    %v436 = vpop.f32.mrf.mxu0
    %v437 = vadd.f32 %v408, %v436
    %438 = vdwg.mxu0
    %439 = vmatpush.msra.mxu0 0.0
    %440 = vmatpush.msra.mxu0 0.0
    %441 = vmatpush.msra.mxu0 0.0
    %442 = vmatpush.msra.mxu0 0.0
    %443 = vmatpush.msra.mxu0 0.0
    %444 = vmatpush.msra.mxu0 0.0
    %445 = vmatpush.msra.mxu0 0.0
    %446 = vmatpush.msra.mxu0 0.0
    %447 = vmatpush.msra.mxu0 0.0
    %448 = vmatpush.msra.mxu0 0.0
    %449 = vmatpush.msra.mxu0 0.0
    %450 = vmatpush.msra.mxu0 0.0
    %451 = vmatpush.msra.mxu0 0.0
    %452 = vmatpush.msra.mxu0 0.0
    %453 = vmatpush.msra.mxu0 %v393
    %454 = vmatpush.msra.mxu0 %v391
    %455 = vmatmul.f32.gmra.mxu0 %v411
    %v456 = vpop.f32.mrf.mxu0
    %v457 = vadd.f32 %v403, %v456
    %458 = vmatmul.f32.gmra.mxu0 %v414
    %v459 = vpop.f32.mrf.mxu0
    %v460 = vadd.f32 %v408, %v459
    %461 = vdwg.mxu0
    %v462 = vtanh.pop %v434
    %v463 = vtanh.pop %v457
    %v464 = vtanh.pop %v437
    %v465 = vtanh.pop %v460
    %s466 = scalar_lea.vmem %s1, 96
    %v467 = vld [vmem:[%s466] sm:$0xff]
    %v468 = vld [vmem:[%s466 + $0x8] sm:$0xff]
    %s469 = scalar_lea.vmem %s2, 96
    %v470 = vld [vmem:[%s469] sm:$0xff]
    %v471 = vld [vmem:[%s469 + $0x8] sm:$0xff]
    %473 = vset.pattern.permute.xlu0 0
    %474 = vperm.xlu0 %473, %v470
    %v475 = vpop.permute.xlu0 %474
    %478 = vset.pattern.permute.xlu0 0
    %479 = vperm.xlu0 %478, %v471
    %v480 = vpop.permute.xlu0 %479
    %v483 = vsel %vm49, %v467, 0
    %v486 = vsel %vm49, %v468, 0
    %488 = vmatpush.msra.mxu0 0.0
    %489 = vmatpush.msra.mxu0 0.0
    %490 = vmatpush.msra.mxu0 0.0
    %491 = vmatpush.msra.mxu0 0.0
    %492 = vmatpush.msra.mxu0 0.0
    %493 = vmatpush.msra.mxu0 0.0
    %494 = vmatpush.msra.mxu0 0.0
    %495 = vmatpush.msra.mxu0 0.0
    %496 = vmatpush.msra.mxu0 0.0
    %497 = vmatpush.msra.mxu0 0.0
    %498 = vmatpush.msra.mxu0 0.0
    %499 = vmatpush.msra.mxu0 0.0
    %500 = vmatpush.msra.mxu0 0.0
    %501 = vmatpush.msra.mxu0 0.0
    %502 = vmatpush.msra.mxu0 %v464
    %503 = vmatpush.msra.mxu0 %v462
    %504 = vmatmul.f32.gmra.mxu0 %v483
    %v505 = vpop.f32.mrf.mxu0
    %v506 = vadd.f32 %v475, %v505
    %507 = vmatmul.f32.gmra.mxu0 %v486
    %v508 = vpop.f32.mrf.mxu0
    %v509 = vadd.f32 %v480, %v508
    %510 = vdwg.mxu0
    %511 = vmatpush.msra.mxu0 0.0
    %512 = vmatpush.msra.mxu0 0.0
    %513 = vmatpush.msra.mxu0 0.0
    %514 = vmatpush.msra.mxu0 0.0
    %515 = vmatpush.msra.mxu0 0.0
    %516 = vmatpush.msra.mxu0 0.0
    %517 = vmatpush.msra.mxu0 0.0
    %518 = vmatpush.msra.mxu0 0.0
    %519 = vmatpush.msra.mxu0 0.0
    %520 = vmatpush.msra.mxu0 0.0
    %521 = vmatpush.msra.mxu0 0.0
    %522 = vmatpush.msra.mxu0 0.0
    %523 = vmatpush.msra.mxu0 0.0
    %524 = vmatpush.msra.mxu0 0.0
    %525 = vmatpush.msra.mxu0 %v465
    %526 = vmatpush.msra.mxu0 %v463
    %527 = vmatmul.f32.gmra.mxu0 %v483
    %v528 = vpop.f32.mrf.mxu0
    %v529 = vadd.f32 %v475, %v528
    %530 = vmatmul.f32.gmra.mxu0 %v486
    %v531 = vpop.f32.mrf.mxu0
    %v532 = vadd.f32 %v480, %v531
    %533 = vdwg.mxu0
    %v534 = vtanh.pop %v506
    %v535 = vtanh.pop %v529
    %v536 = vtanh.pop %v509
    %v537 = vtanh.pop %v532
    %s538 = scalar_lea.vmem %s1, 112
    %v539 = vld [vmem:[%s538] sm:$0xff]
    %v540 = vld [vmem:[%s538 + $0x8] sm:$0xff]
    %s541 = scalar_lea.vmem %s2, 112
    %v542 = vld [vmem:[%s541] sm:$0xff]
    %v543 = vld [vmem:[%s541 + $0x8] sm:$0xff]
    %545 = vset.pattern.permute.xlu0 0
    %546 = vperm.xlu0 %545, %v542
    %v547 = vpop.permute.xlu0 %546
    %550 = vset.pattern.permute.xlu0 0
    %551 = vperm.xlu0 %550, %v543
    %v552 = vpop.permute.xlu0 %551
    %v555 = vsel %vm49, %v539, 0
    %v558 = vsel %vm49, %v540, 0
    %560 = vmatpush.msra.mxu0 0.0
    %561 = vmatpush.msra.mxu0 0.0
    %562 = vmatpush.msra.mxu0 0.0
    %563 = vmatpush.msra.mxu0 0.0
    %564 = vmatpush.msra.mxu0 0.0
    %565 = vmatpush.msra.mxu0 0.0
    %566 = vmatpush.msra.mxu0 0.0
    %567 = vmatpush.msra.mxu0 0.0
    %568 = vmatpush.msra.mxu0 0.0
    %569 = vmatpush.msra.mxu0 0.0
    %570 = vmatpush.msra.mxu0 0.0
    %571 = vmatpush.msra.mxu0 0.0
    %572 = vmatpush.msra.mxu0 0.0
    %573 = vmatpush.msra.mxu0 0.0
    %574 = vmatpush.msra.mxu0 %v536
    %575 = vmatpush.msra.mxu0 %v534
    %576 = vmatmul.f32.gmra.mxu0 %v555
    %v577 = vpop.f32.mrf.mxu0
    %v578 = vadd.f32 %v547, %v577
    %579 = vmatmul.f32.gmra.mxu0 %v558
    %v580 = vpop.f32.mrf.mxu0
    %v581 = vadd.f32 %v552, %v580
    %582 = vdwg.mxu0
    %583 = vmatpush.msra.mxu0 0.0
    %584 = vmatpush.msra.mxu0 0.0
    %585 = vmatpush.msra.mxu0 0.0
    %586 = vmatpush.msra.mxu0 0.0
    %587 = vmatpush.msra.mxu0 0.0
    %588 = vmatpush.msra.mxu0 0.0
    %589 = vmatpush.msra.mxu0 0.0
    %590 = vmatpush.msra.mxu0 0.0
    %591 = vmatpush.msra.mxu0 0.0
    %592 = vmatpush.msra.mxu0 0.0
    %593 = vmatpush.msra.mxu0 0.0
    %594 = vmatpush.msra.mxu0 0.0
    %595 = vmatpush.msra.mxu0 0.0
    %596 = vmatpush.msra.mxu0 0.0
    %597 = vmatpush.msra.mxu0 %v537
    %598 = vmatpush.msra.mxu0 %v535
    %599 = vmatmul.f32.gmra.mxu0 %v555
    %v600 = vpop.f32.mrf.mxu0
    %v601 = vadd.f32 %v547, %v600
    %602 = vmatmul.f32.gmra.mxu0 %v558
    %v603 = vpop.f32.mrf.mxu0
    %v604 = vadd.f32 %v552, %v603
    %605 = vdwg.mxu0
    %v606 = vtanh.pop %v578
    %v607 = vtanh.pop %v601
    %v608 = vtanh.pop %v581
    %v609 = vtanh.pop %v604
    %s610 = scalar_lea.vmem %s1, 128
    %v611 = vld [vmem:[%s610] sm:$0xff]
    %v612 = vld [vmem:[%s610 + $0x8] sm:$0xff]
    %s613 = scalar_lea.vmem %s2, 128
    %v614 = vld [vmem:[%s613] sm:$0xff]
    %v615 = vld [vmem:[%s613 + $0x8] sm:$0xff]
    %617 = vset.pattern.permute.xlu0 0
    %618 = vperm.xlu0 %617, %v614
    %v619 = vpop.permute.xlu0 %618
    %622 = vset.pattern.permute.xlu0 0
    %623 = vperm.xlu0 %622, %v615
    %v624 = vpop.permute.xlu0 %623
    %v627 = vsel %vm49, %v611, 0
    %v630 = vsel %vm49, %v612, 0
    %632 = vmatpush.msra.mxu0 0.0
    %633 = vmatpush.msra.mxu0 0.0
    %634 = vmatpush.msra.mxu0 0.0
    %635 = vmatpush.msra.mxu0 0.0
    %636 = vmatpush.msra.mxu0 0.0
    %637 = vmatpush.msra.mxu0 0.0
    %638 = vmatpush.msra.mxu0 0.0
    %639 = vmatpush.msra.mxu0 0.0
    %640 = vmatpush.msra.mxu0 0.0
    %641 = vmatpush.msra.mxu0 0.0
    %642 = vmatpush.msra.mxu0 0.0
    %643 = vmatpush.msra.mxu0 0.0
    %644 = vmatpush.msra.mxu0 0.0
    %645 = vmatpush.msra.mxu0 0.0
    %646 = vmatpush.msra.mxu0 %v608
    %647 = vmatpush.msra.mxu0 %v606
    %648 = vmatmul.f32.gmra.mxu0 %v627
    %v649 = vpop.f32.mrf.mxu0
    %v650 = vadd.f32 %v619, %v649
    %651 = vmatmul.f32.gmra.mxu0 %v630
    %v652 = vpop.f32.mrf.mxu0
    %v653 = vadd.f32 %v624, %v652
    %654 = vdwg.mxu0
    %655 = vmatpush.msra.mxu0 0.0
    %656 = vmatpush.msra.mxu0 0.0
    %657 = vmatpush.msra.mxu0 0.0
    %658 = vmatpush.msra.mxu0 0.0
    %659 = vmatpush.msra.mxu0 0.0
    %660 = vmatpush.msra.mxu0 0.0
    %661 = vmatpush.msra.mxu0 0.0
    %662 = vmatpush.msra.mxu0 0.0
    %663 = vmatpush.msra.mxu0 0.0
    %664 = vmatpush.msra.mxu0 0.0
    %665 = vmatpush.msra.mxu0 0.0
    %666 = vmatpush.msra.mxu0 0.0
    %667 = vmatpush.msra.mxu0 0.0
    %668 = vmatpush.msra.mxu0 0.0
    %669 = vmatpush.msra.mxu0 %v609
    %670 = vmatpush.msra.mxu0 %v607
    %671 = vmatmul.f32.gmra.mxu0 %v627
    %v672 = vpop.f32.mrf.mxu0
    %v673 = vadd.f32 %v619, %v672
    %674 = vmatmul.f32.gmra.mxu0 %v630
    %v675 = vpop.f32.mrf.mxu0
    %v676 = vadd.f32 %v624, %v675
    %677 = vdwg.mxu0
    %v678 = vtanh.pop %v650
    %v679 = vtanh.pop %v673
    %v680 = vtanh.pop %v653
    %v681 = vtanh.pop %v676
    %s682 = scalar_lea.vmem %s1, 144
    %v683 = vld [vmem:[%s682] sm:$0xff]
    %v684 = vld [vmem:[%s682 + $0x8] sm:$0xff]
    %s685 = scalar_lea.vmem %s2, 144
    %v686 = vld [vmem:[%s685] sm:$0xff]
    %v687 = vld [vmem:[%s685 + $0x8] sm:$0xff]
    %689 = vset.pattern.permute.xlu0 0
    %690 = vperm.xlu0 %689, %v686
    %v691 = vpop.permute.xlu0 %690
    %694 = vset.pattern.permute.xlu0 0
    %695 = vperm.xlu0 %694, %v687
    %v696 = vpop.permute.xlu0 %695
    %v699 = vsel %vm49, %v683, 0
    %v702 = vsel %vm49, %v684, 0
    %704 = vmatpush.msra.mxu0 0.0
    %705 = vmatpush.msra.mxu0 0.0
    %706 = vmatpush.msra.mxu0 0.0
    %707 = vmatpush.msra.mxu0 0.0
    %708 = vmatpush.msra.mxu0 0.0
    %709 = vmatpush.msra.mxu0 0.0
    %710 = vmatpush.msra.mxu0 0.0
    %711 = vmatpush.msra.mxu0 0.0
    %712 = vmatpush.msra.mxu0 0.0
    %713 = vmatpush.msra.mxu0 0.0
    %714 = vmatpush.msra.mxu0 0.0
    %715 = vmatpush.msra.mxu0 0.0
    %716 = vmatpush.msra.mxu0 0.0
    %717 = vmatpush.msra.mxu0 0.0
    %718 = vmatpush.msra.mxu0 %v680
    %719 = vmatpush.msra.mxu0 %v678
    %720 = vmatmul.f32.gmra.mxu0 %v699
    %v721 = vpop.f32.mrf.mxu0
    %v722 = vadd.f32 %v691, %v721
    %723 = vmatmul.f32.gmra.mxu0 %v702
    %v724 = vpop.f32.mrf.mxu0
    %v725 = vadd.f32 %v696, %v724
    %726 = vdwg.mxu0
    %727 = vmatpush.msra.mxu0 0.0
    %728 = vmatpush.msra.mxu0 0.0
    %729 = vmatpush.msra.mxu0 0.0
    %730 = vmatpush.msra.mxu0 0.0
    %731 = vmatpush.msra.mxu0 0.0
    %732 = vmatpush.msra.mxu0 0.0
    %733 = vmatpush.msra.mxu0 0.0
    %734 = vmatpush.msra.mxu0 0.0
    %735 = vmatpush.msra.mxu0 0.0
    %736 = vmatpush.msra.mxu0 0.0
    %737 = vmatpush.msra.mxu0 0.0
    %738 = vmatpush.msra.mxu0 0.0
    %739 = vmatpush.msra.mxu0 0.0
    %740 = vmatpush.msra.mxu0 0.0
    %741 = vmatpush.msra.mxu0 %v681
    %742 = vmatpush.msra.mxu0 %v679
    %743 = vmatmul.f32.gmra.mxu0 %v699
    %v744 = vpop.f32.mrf.mxu0
    %v745 = vadd.f32 %v691, %v744
    %746 = vmatmul.f32.gmra.mxu0 %v702
    %v747 = vpop.f32.mrf.mxu0
    %v748 = vadd.f32 %v696, %v747
    %749 = vdwg.mxu0
    %v750 = vtanh.pop %v722
    %v751 = vtanh.pop %v745
    %v752 = vtanh.pop %v725
    %v753 = vtanh.pop %v748
    %s754 = scalar_lea.vmem %s1, 160
    %v755 = vld [vmem:[%s754] sm:$0xff]
    %v756 = vld [vmem:[%s754 + $0x8] sm:$0xff]
    %s757 = scalar_lea.vmem %s2, 160
    %v758 = vld [vmem:[%s757] sm:$0xff]
    %v759 = vld [vmem:[%s757 + $0x8] sm:$0xff]
    %761 = vset.pattern.permute.xlu0 0
    %762 = vperm.xlu0 %761, %v758
    %v763 = vpop.permute.xlu0 %762
    %766 = vset.pattern.permute.xlu0 0
    %767 = vperm.xlu0 %766, %v759
    %v768 = vpop.permute.xlu0 %767
    %v771 = vsel %vm49, %v755, 0
    %v774 = vsel %vm49, %v756, 0
    %776 = vmatpush.msra.mxu0 0.0
    %777 = vmatpush.msra.mxu0 0.0
    %778 = vmatpush.msra.mxu0 0.0
    %779 = vmatpush.msra.mxu0 0.0
    %780 = vmatpush.msra.mxu0 0.0
    %781 = vmatpush.msra.mxu0 0.0
    %782 = vmatpush.msra.mxu0 0.0
    %783 = vmatpush.msra.mxu0 0.0
    %784 = vmatpush.msra.mxu0 0.0
    %785 = vmatpush.msra.mxu0 0.0
    %786 = vmatpush.msra.mxu0 0.0
    %787 = vmatpush.msra.mxu0 0.0
    %788 = vmatpush.msra.mxu0 0.0
    %789 = vmatpush.msra.mxu0 0.0
    %790 = vmatpush.msra.mxu0 %v752
    %791 = vmatpush.msra.mxu0 %v750
    %792 = vmatmul.f32.gmra.mxu0 %v771
    %v793 = vpop.f32.mrf.mxu0
    %v794 = vadd.f32 %v763, %v793
    %795 = vmatmul.f32.gmra.mxu0 %v774
    %v796 = vpop.f32.mrf.mxu0
    %v797 = vadd.f32 %v768, %v796
    %798 = vdwg.mxu0
    %799 = vmatpush.msra.mxu0 0.0
    %800 = vmatpush.msra.mxu0 0.0
    %801 = vmatpush.msra.mxu0 0.0
    %802 = vmatpush.msra.mxu0 0.0
    %803 = vmatpush.msra.mxu0 0.0
    %804 = vmatpush.msra.mxu0 0.0
    %805 = vmatpush.msra.mxu0 0.0
    %806 = vmatpush.msra.mxu0 0.0
    %807 = vmatpush.msra.mxu0 0.0
    %808 = vmatpush.msra.mxu0 0.0
    %809 = vmatpush.msra.mxu0 0.0
    %810 = vmatpush.msra.mxu0 0.0
    %811 = vmatpush.msra.mxu0 0.0
    %812 = vmatpush.msra.mxu0 0.0
    %813 = vmatpush.msra.mxu0 %v753
    %814 = vmatpush.msra.mxu0 %v751
    %815 = vmatmul.f32.gmra.mxu0 %v771
    %v816 = vpop.f32.mrf.mxu0
    %v817 = vadd.f32 %v763, %v816
    %818 = vmatmul.f32.gmra.mxu0 %v774
    %v819 = vpop.f32.mrf.mxu0
    %v820 = vadd.f32 %v768, %v819
    %821 = vdwg.mxu0
    %822 = vst [vmem:[#allocation5] sm:$0xff] %v794
    %823 = vst [vmem:[#allocation5 + $0x8] sm:$0xff] %v817
    %824 = vst [vmem:[#allocation5 + $0x10] sm:$0xff] %v797
    %825 = vst [vmem:[#allocation5 + $0x18] sm:$0xff] %v820
    // Predicated region
    $region18: #{ae_forward.1} parent=1 // pred_check
      _
    $region19: #{ae_forward.1} parent=1 // pred_check_branch
      %827 = sbr.rel (0) target = $region21
    $region20: #{ae_forward.1} parent=1 // pred_region
      %829 = vsyncadd [#allocation4], 0
      %s830 = sshll.u32 [#allocation5], 4
      %s831 = int_to_ptr.vmem [resolvable:$true] %s830
      %s832 = sshll.u32 %s3, 4
      %s833 = int_to_ptr.hbm [resolvable:$true] %s832
      %838 = dma.vmem_to_hbm [thread:$0]  %s831, 512, %s833, [#allocation4], 256, 256, 16
    $region21: #{ae_forward.1} parent=1 // pred_fallthru
      _
    // Predicated region
    $region22: #{ae_forward.1} parent=1 // pred_check
      _
    $region23: #{ae_forward.1} parent=1 // pred_check_branch
      %840 = sbr.rel (0) target = $region25
    $region24: #{ae_forward.1} parent=1 // pred_region
      %842 = dma.done [#allocation4], 512
    $region25: #{ae_forward.1} parent=1 // pred_fallthru
      _
    %843 = vsyncpa [#allocation3], 1
    %844 = vsyncpa [#allocation4], 1

</llo_original>
